<compile_context>
chip_gen: v5e
topology: v5e:2x2
jax: 0.10.0
libtpu: 0.0.40
codegen_flags: <defaults>
</compile_context>

<pallas_src>
import functools

import jax
import jax.numpy as jnp
from jax.experimental import pallas as pl
from jax.experimental.pallas import tpu as pltpu


def _downsample_kernel(phase_ref, halo_ref, w_ref, shift_ref, out_ref, *,
                       cin, cout, wo1):
    """One lane tile: rebuild the 9 stride-2 taps, conv+BN+ReLU and maxpool."""
    tm = phase_ref.shape[1]

    # All elementwise / matmul math in f32 (v5e-safe); bf16 is storage-only.
    t = phase_ref[...].astype(jnp.float32)                # (4*Cin, tm)
    h = halo_ref[...].astype(jnp.float32)                 # (4*Cin, 128)
    ext_pool = jnp.concatenate([t, h], axis=-1)           # (4*Cin, tm + 128)
    # Conv uses zero padding; -inf marks padded pixels (pool keeps the -inf).
    ext_conv = jnp.where(ext_pool == -jnp.inf,
                         jnp.zeros_like(ext_pool), ext_pool)
    w_flat = w_ref[...]                                   # (Cout, 9*Cin) f32

    acc = jnp.zeros((cout, tm), jnp.float32)
    pool = None
    for ky in range(3):
        pr, dy = ky % 2, ky // 2
        for kx in range(3):
            pc, dx = kx % 2, kx // 2
            row0 = (pr * 2 + pc) * cin                    # phase row group
            off = dy * wo1 + dx                           # static lane shift
            k = ky * 3 + kx
            tap_c = ext_conv[row0:row0 + cin, off:off + tm]
            acc = acc + jnp.dot(w_flat[:, k * cin:(k + 1) * cin], tap_c,
                                preferred_element_type=jnp.float32)
            tap_p = ext_pool[row0:row0 + cin, off:off + tm]
            pool = tap_p if pool is None else jnp.maximum(pool, tap_p)

    conv = jnp.maximum(acc + shift_ref[...], 0.0)         # folded BN + ReLU
    # Single fused, lane-dense output block: [conv ; pool] along channels.
    out_ref[0:cout, :] = conv.astype(out_ref.dtype)
    out_ref[cout:cout + cin, :] = pool.astype(out_ref.dtype)


def _auto_io_dtype():
    """bf16 HBM storage on v6e/v7x (bf16 VPU + mem-bound); f32 elsewhere."""
    try:
        kind = jax.devices()[0].device_kind.lower()
    except Exception:
        return jnp.float32
    if "v6" in kind or "v7" in kind:
        return jnp.bfloat16
    return jnp.float32


def downsample_forward(x, w, b, gamma, beta, running_mean, running_var,
                       eps=1e-5, tm=4096, io_dtype=None, channel_major=False):
    """x: (N, Cin, H, W) float32 NCHW.

    Returns (N, Cout+Cin, Ho, Wo) NCHW like the PyTorch module, or with
    channel_major=True the transpose-free (Cout+Cin, N, Ho, Wo) layout.
    """
    N, Cin, H, W = x.shape
    Cout = w.shape[0]
    Ho = (H - 1) // 2 + 1          # = (H + 2*1 - 3)//2 + 1
    Wo = (W - 1) // 2 + 1
    Ho1, Wo1 = Ho + 1, Wo + 1
    E = Ho1 * Wo1                  # extended per-image output block
    Mx = N * E
    assert Wo + 2 <= 128, "tap halo must fit in one 128-lane block"

    if io_dtype is None:
        io_dtype = _auto_io_dtype()
    io_dtype = jnp.dtype(io_dtype)

    # Fold conv bias + inference BatchNorm: scale into the weights, shift as a
    # per-channel epilogue add.  Weights/shift stay f32 (tiny, ~resident).
    scale = gamma / jnp.sqrt(running_var + eps)                      # (Cout,)
    shift = ((b - running_mean) * scale + beta).reshape(Cout, 1)
    shift = shift.astype(jnp.float32)
    w_mat = (jnp.transpose(w, (0, 2, 3, 1)).reshape(Cout, 9 * Cin)
             * scale[:, None]).astype(jnp.float32)                  # (Cout,9Cin)

    # 4-phase repack of the -inf padded input (one fused XLA pass, same byte
    # count as the padded input).  Works for odd H/W via extra bottom/right
    # -inf padding that only invalid extended positions ever read.
    xp = jnp.pad(x, ((0, 0), (0, 0),
                     (1, 2 * Ho1 - H - 1), (1, 2 * Wo1 - W - 1)),
                 constant_values=-jnp.inf)
    phases = jnp.transpose(xp.reshape(N, Cin, Ho1, 2, Wo1, 2),
                           (3, 5, 1, 0, 2, 4)).reshape(4 * Cin, Mx)

    # Row tile: multiple of 128 lanes, large (per-step overhead dominates at
    # small tiles) but capped so the grid keeps >= 2 tiles (v7x megacore).
    tm_cap = 128 * max(1, pl.cdiv(Mx, 2 * 128))
    tm = max(128, (min(tm, tm_cap) // 128) * 128)
    n_tiles = pl.cdiv(Mx, tm)
    Mx_pad = n_tiles * tm
    # Tail pad + one extra 128-lane block backing the last tile's halo; it is
    # only read for discarded extended positions and fuses into the transpose
    # above (no extra HBM pass, unlike the old full-tensor tail pad).
    phases = jnp.pad(phases, ((0, 0), (0, Mx_pad + 128 - Mx)),
                     constant_values=-jnp.inf).astype(io_dtype)

    bpt = tm // 128                      # 128-lane blocks per tile
    Ctot = Cout + Cin
    itemsize = io_dtype.itemsize
    cost = pl.CostEstimate(
        flops=2 * Mx_pad * 9 * Cin * Cout + 9 * Mx_pad * Cin,
        transcendentals=0,
        bytes_accessed=((4 * Cin) * (Mx_pad + 128) * itemsize
                        + Ctot * Mx_pad * itemsize
                        + (w_mat.size + Cout) * 4))

    kernel = functools.partial(_downsample_kernel, cin=Cin, cout=Cout, wo1=Wo1)
    out_flat = pl.pallas_call(
        kernel,
        out_shape=jax.ShapeDtypeStruct((Ctot, Mx_pad), io_dtype),
        grid_spec=pltpu.PrefetchScalarGridSpec(
            num_scalar_prefetch=0,
            grid=(n_tiles,),
            in_specs=[
                pl.BlockSpec((4 * Cin, tm), lambda i: (0, i)),       # phases
                pl.BlockSpec((4 * Cin, 128),
                             lambda i: (0, (i + 1) * bpt)),          # halo
                pl.BlockSpec((Cout, 9 * Cin), lambda i: (0, 0)),     # weights
                pl.BlockSpec((Cout, 1), lambda i: (0, 0)),           # BN shift
            ],
            out_specs=pl.BlockSpec((Ctot, tm), lambda i: (0, i)),    # fused out
        ),
        compiler_params=pltpu.CompilerParams(
            dimension_semantics=("parallel",),
            vmem_limit_bytes=32 * 1024 * 1024),
        cost_estimate=cost,
    )(phases, phases, w_mat, shift)

    # Drop the extended row/col and tail padding; no wrapper concat needed.
    out = out_flat[:, :Mx].reshape(Ctot, N, Ho1, Wo1)[:, :, :Ho, :Wo]
    if channel_major:
        return out                                   # (Cout+Cin, N, Ho, Wo)
    return jnp.transpose(out, (1, 0, 2, 3))          # NCHW like the module


def _reference_forward(x, w, b, gamma, beta, mean, var, eps=1e-5):
    """Pure-JAX reference (inference-mode BatchNorm)."""
    y = jax.lax.conv_general_dilated(
        x, w, window_strides=(2, 2), padding=((1, 1), (1, 1)),
        dimension_numbers=("NCHW", "OIHW", "NCHW"))
    y = y + b[None, :, None, None]
    y = ((y - mean[None, :, None, None])
         / jnp.sqrt(var[None, :, None, None] + eps)
         * gamma[None, :, None, None] + beta[None, :, None, None])
    y = jnp.maximum(y, 0.0)
    p = jax.lax.reduce_window(
        x, -jnp.inf, jax.lax.max,
        window_dimensions=(1, 1, 3, 3), window_strides=(1, 1, 2, 2),
        padding=((0, 0), (0, 0), (1, 1), (1, 1)))
    return jnp.concatenate([y, p], axis=1)


if __name__ == "__main__":
    key = jax.random.PRNGKey(0)
    kx_, kw, kb, kg, kbt, km, kv = jax.random.split(key, 7)

    N, Cin, H, W = 2, 4, 16, 16
    Cout = 8

    x = jax.random.normal(kx_, (N, Cin, H, W), dtype=jnp.float32)

    # Deterministic synthetic parameters (Conv2d + BatchNorm2d running stats).
    w = 0.1 * jax.random.normal(kw, (Cout, Cin, 3, 3), dtype=jnp.float32)
    b = 0.1 * jax.random.normal(kb, (Cout,), dtype=jnp.float32)
    gamma = 1.0 + 0.1 * jax.random.normal(kg, (Cout,), dtype=jnp.float32)
    beta = 0.1 * jax.random.normal(kbt, (Cout,), dtype=jnp.float32)
    running_mean = 0.1 * jax.random.normal(km, (Cout,), dtype=jnp.float32)
    running_var = jax.random.uniform(kv, (Cout,), minval=0.5, maxval=1.5,
                                     dtype=jnp.float32)

    ref = _reference_forward(x, w, b, gamma, beta, running_mean, running_var)

    # Exact f32 I/O path (also the v5e default).
    out = downsample_forward(x, w, b, gamma, beta, running_mean, running_var,
                             io_dtype=jnp.float32)
    out = jax.block_until_ready(out)
    assert out.shape == (N, Cout + Cin, H // 2, W // 2), out.shape
    assert jnp.allclose(out, ref, rtol=1e-4, atol=1e-4), "f32 mismatch vs ref"

    # bf16 I/O path (v6e/v7x memory-bound option); looser tolerance.
    out_bf16 = downsample_forward(x, w, b, gamma, beta, running_mean,
                                  running_var, io_dtype=jnp.bfloat16)
    out_bf16 = jax.block_until_ready(out_bf16)
    assert jnp.allclose(out_bf16.astype(jnp.float32), ref,
                        rtol=5e-2, atol=5e-2), "bf16 mismatch vs ref"

    # Auto dtype + channel-major output (skips the final NCHW transpose).
    out_cm = downsample_forward(x, w, b, gamma, beta, running_mean,
                                running_var, channel_major=True)
    out_cm = jax.block_until_ready(out_cm)
    assert out_cm.shape == (Cout + Cin, N, H // 2, W // 2), out_cm.shape
    assert jnp.allclose(jnp.transpose(out_cm.astype(jnp.float32),
                                      (1, 0, 2, 3)),
                        ref, rtol=5e-2, atol=5e-2), "auto path mismatch vs ref"

    print("KERNEL_OK")
</pallas_src>

<mosaic_0001>
module attributes {stable_mosaic.version = 11 : i64} {
  func.func @_downsample_kernel(%arg0: i32, %arg1: memref<16x128xf32, #tpu.memory_space<vmem>>, %arg2: memref<16x128xf32, #tpu.memory_space<vmem>>, %arg3: memref<8x36xf32, #tpu.memory_space<vmem>>, %arg4: memref<8x1xf32, #tpu.memory_space<vmem>>, %arg5: memref<12x128xf32, #tpu.memory_space<vmem>>) attributes {dimension_semantics = [#tpu.dimension_semantics<parallel>], iteration_bounds = array<i64: 2>, scalar_prefetch = 0 : i64, scratch_operands = 0 : i64, tpu.core_type = #tpu.core_type<tc>, window_params = [{transform_indices = @transform_0, window_bounds = array<i64: 16, 128>}, {transform_indices = @transform_1, window_bounds = array<i64: 16, 128>}, {pipeline_mode = #tpu.pipeline_mode<synchronous>, transform_indices = @transform_2, window_bounds = array<i64: 8, 36>}, {pipeline_mode = #tpu.pipeline_mode<synchronous>, transform_indices = @transform_3, window_bounds = array<i64: 8, 1>}, {transform_indices = @transform_4, window_bounds = array<i64: 12, 128>}]} {
    %c0 = arith.constant 0 : index
    %c0_0 = arith.constant 0 : index
    %0 = vector.load %arg1[%c0, %c0_0] : memref<16x128xf32, #tpu.memory_space<vmem>>, vector<16x128xf32>
    %c0_1 = arith.constant 0 : index
    %c0_2 = arith.constant 0 : index
    %1 = vector.load %arg2[%c0_1, %c0_2] : memref<16x128xf32, #tpu.memory_space<vmem>>, vector<16x128xf32>
    %2 = tpu.concatenate %0, %1 in 1 : vector<16x128xf32>, vector<16x128xf32> -> vector<16x256xf32>
    %cst = arith.constant 0xFF800000 : f32
    %3 = vector.broadcast %cst : f32 to vector<16x256xf32>
    %4 = arith.cmpf oeq, %2, %3 : vector<16x256xf32>
    %cst_3 = arith.constant 0.000000e+00 : f32
    %5 = vector.broadcast %cst_3 : f32 to vector<16x256xf32>
    %6 = arith.select %4, %5, %2 : vector<16x256xi1>, vector<16x256xf32>
    %c0_4 = arith.constant 0 : index
    %c0_5 = arith.constant 0 : index
    %7 = vector.load %arg3[%c0_4, %c0_5] : memref<8x36xf32, #tpu.memory_space<vmem>>, vector<8x36xf32>
    %cst_6 = arith.constant 0.000000e+00 : f32
    %8 = vector.broadcast %cst_6 : f32 to vector<8x128xf32>
    %9 = vector.extract_strided_slice %6 {offsets = [0, 0], sizes = [4, 128], strides = [1, 1]} : vector<16x256xf32> to vector<4x128xf32>
    %10 = vector.extract_strided_slice %7 {offsets = [0, 0], sizes = [8, 4], strides = [1, 1]} : vector<8x36xf32> to vector<8x4xf32>
    %cst_7 = arith.constant dense<0.000000e+00> : vector<8x128xf32>
    %11 = tpu.matmul %10, %9, %cst_7 {dimension_numbers = #tpu.dot_dimension_numbers<[1], [0], [0], [1], [0, 0, 1, 1], [], []>} : vector<8x4xf32>, vector<4x128xf32>, vector<8x128xf32> -> vector<8x128xf32>
    %12 = arith.addf %8, %11 : vector<8x128xf32>
    %13 = vector.extract_strided_slice %2 {offsets = [0, 0], sizes = [4, 128], strides = [1, 1]} : vector<16x256xf32> to vector<4x128xf32>
    %14 = vector.extract_strided_slice %6 {offsets = [4, 0], sizes = [4, 128], strides = [1, 1]} : vector<16x256xf32> to vector<4x128xf32>
    %15 = vector.extract_strided_slice %7 {offsets = [0, 4], sizes = [8, 4], strides = [1, 1]} : vector<8x36xf32> to vector<8x4xf32>
    %cst_8 = arith.constant dense<0.000000e+00> : vector<8x128xf32>
    %16 = tpu.matmul %15, %14, %cst_8 {dimension_numbers = #tpu.dot_dimension_numbers<[1], [0], [0], [1], [0, 0, 1, 1], [], []>} : vector<8x4xf32>, vector<4x128xf32>, vector<8x128xf32> -> vector<8x128xf32>
    %17 = arith.addf %12, %16 : vector<8x128xf32>
    %18 = vector.extract_strided_slice %2 {offsets = [4, 0], sizes = [4, 128], strides = [1, 1]} : vector<16x256xf32> to vector<4x128xf32>
    %19 = arith.maximumf %13, %18 : vector<4x128xf32>
    %20 = vector.extract_strided_slice %6 {offsets = [0, 1], sizes = [4, 128], strides = [1, 1]} : vector<16x256xf32> to vector<4x128xf32>
    %21 = vector.extract_strided_slice %7 {offsets = [0, 8], sizes = [8, 4], strides = [1, 1]} : vector<8x36xf32> to vector<8x4xf32>
    %cst_9 = arith.constant dense<0.000000e+00> : vector<8x128xf32>
    %22 = tpu.matmul %21, %20, %cst_9 {dimension_numbers = #tpu.dot_dimension_numbers<[1], [0], [0], [1], [0, 0, 1, 1], [], []>} : vector<8x4xf32>, vector<4x128xf32>, vector<8x128xf32> -> vector<8x128xf32>
    %23 = arith.addf %17, %22 : vector<8x128xf32>
    %24 = vector.extract_strided_slice %2 {offsets = [0, 1], sizes = [4, 128], strides = [1, 1]} : vector<16x256xf32> to vector<4x128xf32>
    %25 = arith.maximumf %19, %24 : vector<4x128xf32>
    %26 = vector.extract_strided_slice %6 {offsets = [8, 0], sizes = [4, 128], strides = [1, 1]} : vector<16x256xf32> to vector<4x128xf32>
    %27 = vector.extract_strided_slice %7 {offsets = [0, 12], sizes = [8, 4], strides = [1, 1]} : vector<8x36xf32> to vector<8x4xf32>
    %cst_10 = arith.constant dense<0.000000e+00> : vector<8x128xf32>
    %28 = tpu.matmul %27, %26, %cst_10 {dimension_numbers = #tpu.dot_dimension_numbers<[1], [0], [0], [1], [0, 0, 1, 1], [], []>} : vector<8x4xf32>, vector<4x128xf32>, vector<8x128xf32> -> vector<8x128xf32>
    %29 = arith.addf %23, %28 : vector<8x128xf32>
    %30 = vector.extract_strided_slice %2 {offsets = [8, 0], sizes = [4, 128], strides = [1, 1]} : vector<16x256xf32> to vector<4x128xf32>
    %31 = arith.maximumf %25, %30 : vector<4x128xf32>
    %32 = vector.extract_strided_slice %6 {offsets = [12, 0], sizes = [4, 128], strides = [1, 1]} : vector<16x256xf32> to vector<4x128xf32>
    %33 = vector.extract_strided_slice %7 {offsets = [0, 16], sizes = [8, 4], strides = [1, 1]} : vector<8x36xf32> to vector<8x4xf32>
    %cst_11 = arith.constant dense<0.000000e+00> : vector<8x128xf32>
    %34 = tpu.matmul %33, %32, %cst_11 {dimension_numbers = #tpu.dot_dimension_numbers<[1], [0], [0], [1], [0, 0, 1, 1], [], []>} : vector<8x4xf32>, vector<4x128xf32>, vector<8x128xf32> -> vector<8x128xf32>
    %35 = arith.addf %29, %34 : vector<8x128xf32>
    %36 = vector.extract_strided_slice %2 {offsets = [12, 0], sizes = [4, 128], strides = [1, 1]} : vector<16x256xf32> to vector<4x128xf32>
    %37 = arith.maximumf %31, %36 : vector<4x128xf32>
    %38 = vector.extract_strided_slice %6 {offsets = [8, 1], sizes = [4, 128], strides = [1, 1]} : vector<16x256xf32> to vector<4x128xf32>
    %39 = vector.extract_strided_slice %7 {offsets = [0, 20], sizes = [8, 4], strides = [1, 1]} : vector<8x36xf32> to vector<8x4xf32>
    %cst_12 = arith.constant dense<0.000000e+00> : vector<8x128xf32>
    %40 = tpu.matmul %39, %38, %cst_12 {dimension_numbers = #tpu.dot_dimension_numbers<[1], [0], [0], [1], [0, 0, 1, 1], [], []>} : vector<8x4xf32>, vector<4x128xf32>, vector<8x128xf32> -> vector<8x128xf32>
    %41 = arith.addf %35, %40 : vector<8x128xf32>
    %42 = vector.extract_strided_slice %2 {offsets = [8, 1], sizes = [4, 128], strides = [1, 1]} : vector<16x256xf32> to vector<4x128xf32>
    %43 = arith.maximumf %37, %42 : vector<4x128xf32>
    %44 = vector.extract_strided_slice %6 {offsets = [0, 9], sizes = [4, 128], strides = [1, 1]} : vector<16x256xf32> to vector<4x128xf32>
    %45 = vector.extract_strided_slice %7 {offsets = [0, 24], sizes = [8, 4], strides = [1, 1]} : vector<8x36xf32> to vector<8x4xf32>
    %cst_13 = arith.constant dense<0.000000e+00> : vector<8x128xf32>
    %46 = tpu.matmul %45, %44, %cst_13 {dimension_numbers = #tpu.dot_dimension_numbers<[1], [0], [0], [1], [0, 0, 1, 1], [], []>} : vector<8x4xf32>, vector<4x128xf32>, vector<8x128xf32> -> vector<8x128xf32>
    %47 = arith.addf %41, %46 : vector<8x128xf32>
    %48 = vector.extract_strided_slice %2 {offsets = [0, 9], sizes = [4, 128], strides = [1, 1]} : vector<16x256xf32> to vector<4x128xf32>
    %49 = arith.maximumf %43, %48 : vector<4x128xf32>
    %50 = vector.extract_strided_slice %6 {offsets = [4, 9], sizes = [4, 128], strides = [1, 1]} : vector<16x256xf32> to vector<4x128xf32>
    %51 = vector.extract_strided_slice %7 {offsets = [0, 28], sizes = [8, 4], strides = [1, 1]} : vector<8x36xf32> to vector<8x4xf32>
    %cst_14 = arith.constant dense<0.000000e+00> : vector<8x128xf32>
    %52 = tpu.matmul %51, %50, %cst_14 {dimension_numbers = #tpu.dot_dimension_numbers<[1], [0], [0], [1], [0, 0, 1, 1], [], []>} : vector<8x4xf32>, vector<4x128xf32>, vector<8x128xf32> -> vector<8x128xf32>
    %53 = arith.addf %47, %52 : vector<8x128xf32>
    %54 = vector.extract_strided_slice %2 {offsets = [4, 9], sizes = [4, 128], strides = [1, 1]} : vector<16x256xf32> to vector<4x128xf32>
    %55 = arith.maximumf %49, %54 : vector<4x128xf32>
    %56 = vector.extract_strided_slice %6 {offsets = [0, 10], sizes = [4, 128], strides = [1, 1]} : vector<16x256xf32> to vector<4x128xf32>
    %57 = vector.extract_strided_slice %7 {offsets = [0, 32], sizes = [8, 4], strides = [1, 1]} : vector<8x36xf32> to vector<8x4xf32>
    %cst_15 = arith.constant dense<0.000000e+00> : vector<8x128xf32>
    %58 = tpu.matmul %57, %56, %cst_15 {dimension_numbers = #tpu.dot_dimension_numbers<[1], [0], [0], [1], [0, 0, 1, 1], [], []>} : vector<8x4xf32>, vector<4x128xf32>, vector<8x128xf32> -> vector<8x128xf32>
    %59 = arith.addf %53, %58 : vector<8x128xf32>
    %60 = vector.extract_strided_slice %2 {offsets = [0, 10], sizes = [4, 128], strides = [1, 1]} : vector<16x256xf32> to vector<4x128xf32>
    %61 = arith.maximumf %55, %60 : vector<4x128xf32>
    %c0_16 = arith.constant 0 : index
    %c0_17 = arith.constant 0 : index
    %62 = vector.load %arg4[%c0_16, %c0_17] : memref<8x1xf32, #tpu.memory_space<vmem>>, vector<8x1xf32>
    %63 = vector.broadcast %62 : vector<8x1xf32> to vector<8x128xf32>
    %64 = arith.addf %59, %63 : vector<8x128xf32>
    %cst_18 = arith.constant 0.000000e+00 : f32
    %65 = vector.broadcast %cst_18 : f32 to vector<8x128xf32>
    %66 = arith.maximumf %64, %65 : vector<8x128xf32>
    %c0_19 = arith.constant 0 : index
    %c0_20 = arith.constant 0 : index
    %67 = vector.load %arg5[%c0_19, %c0_20] : memref<12x128xf32, #tpu.memory_space<vmem>>, vector<8x128xf32>
    tpu.vector_store %arg5[%c0_19, %c0_20], %66 {strides = array<i32>} : memref<12x128xf32, #tpu.memory_space<vmem>>, vector<8x128xf32>,
    %c8 = arith.constant 8 : index
    %c0_21 = arith.constant 0 : index
    %68 = vector.load %arg5[%c8, %c0_21] : memref<12x128xf32, #tpu.memory_space<vmem>>, vector<4x128xf32>
    tpu.vector_store %arg5[%c8, %c0_21], %61 {strides = array<i32>} : memref<12x128xf32, #tpu.memory_space<vmem>>, vector<4x128xf32>,
    return
  }
  func.func @transform_0(%arg0: i32) -> (i32, i32) {
    %c0_i32 = arith.constant 0 : i32
    %c0_i32_0 = arith.constant 0 : i32
    return %c0_i32, %arg0 : i32, i32
  }
  func.func @transform_1(%arg0: i32) -> (i32, i32) {
    %c1_i32 = arith.constant 1 : i32
    %0 = arith.addi %arg0, %c1_i32 : i32
    %c1_i32_0 = arith.constant 1 : i32
    %1 = arith.muli %0, %c1_i32_0 : i32
    %c0_i32 = arith.constant 0 : i32
    %c0_i32_1 = arith.constant 0 : i32
    return %c0_i32, %1 : i32, i32
  }
  func.func @transform_2(%arg0: i32) -> (i32, i32) {
    %c0_i32 = arith.constant 0 : i32
    %c0_i32_0 = arith.constant 0 : i32
    %c0_i32_1 = arith.constant 0 : i32
    return %c0_i32, %c0_i32_0 : i32, i32
  }
  func.func @transform_3(%arg0: i32) -> (i32, i32) {
    %c0_i32 = arith.constant 0 : i32
    %c0_i32_0 = arith.constant 0 : i32
    %c0_i32_1 = arith.constant 0 : i32
    return %c0_i32, %c0_i32_0 : i32, i32
  }
  func.func @transform_4(%arg0: i32) -> (i32, i32) {
    %c0_i32 = arith.constant 0 : i32
    %c0_i32_0 = arith.constant 0 : i32
    return %c0_i32, %arg0 : i32, i32
  }
}

</mosaic_0001>

<llo_original>
// kernel: tpu_custom_call.1
$region0: #{tpu_custom_call.1}
  #allocation0 [shape = 'u32[]', space=smem, size = 0x4, offset = 0x4, fixed_abs, tag = 'smem constant byte address 0x4 - core index']
  #allocation1 [shape = 'u32[72,128]{1,0:T(1,128)}', space=vmem, size = 0x9000, scoped, tag = 'internal scratch']
  %s0 = inlined_call_operand.hbm [shape: f32[16,384], index: 0, kind: input, shape index: {}]
  %s1 = inlined_call_operand.hbm [shape: f32[16,384], index: 1, kind: input, shape index: {}]
  %s2 = inlined_call_operand.vmem [shape: f32[8,36], index: 2, kind: input, shape index: {}]
  %s3 = inlined_call_operand.vmem [shape: f32[8,1], index: 3, kind: input, shape index: {}]
  %s4 = inlined_call_operand.hbm [shape: f32[12,256], index: 4, kind: output, shape index: {}]
  %s5 = sld [smem:[#allocation0]]
  $region57: #{tpu_custom_call.1} parent=0
    _
  %s7 = ssub.s32 1, %s5
  %s8 = scalar_select 0, %s7, %s5
  $region1: #{tpu_custom_call.1} parent=0
    #allocation2 [shape = 'u8[16384]{0}', space=vmem, size = 0x4000, scoped, tag = 'input window, operand 0']
    #allocation3 [shape = 's32[2]{0}', space=sflag, size = 0x8, scoped, tag = 'scoped memory for tpu_custom_call.1']
    #allocation4 [shape = 's32[2]{0}', space=sflag, size = 0x8, scoped, tag = 'scoped memory for tpu_custom_call.1']
    #allocation5 [shape = 'u8[16384]{0}', space=vmem, size = 0x4000, scoped, tag = 'input window, operand 1']
    #allocation6 [shape = 's32[2]{0}', space=sflag, size = 0x8, scoped, tag = 'scoped memory for tpu_custom_call.1']
    #allocation7 [shape = 'u8[16384]{0}', space=vmem, size = 0x4000, scoped, tag = 'output window, operand 0']
    %9 = vsyncpa [#allocation3], 0
    %s10 = scalar_lea.sflag [#allocation3], 1
    %11 = vsyncpa %s10, 0
    %12 = vsyncpa [#allocation6], 0
    %s13 = scalar_lea.sflag [#allocation6], 1
    %14 = vsyncpa %s13, 0
    %15 = vsyncpa [#allocation4], 0
    %s16 = scalar_lea.sflag [#allocation4], 1
    %17 = vsyncpa %s16, 0
    loop: start=0, step=1, limit=4
    $region2: #{tpu_custom_call.1} parent=1 // loop_pre_header
      _
    $region3: #{tpu_custom_call.1} parent=1 // loop_header
      %s19 = sphi 0, %s23
      %p20 = scmp.ge.s32.totalorder %s19, 4
      %s29 = sphi 0, %s31
      %s32 = sphi 0, %s29
      %s33 = sphi 0, %s32
      %s49 = sphi 0, %s33
      %s57 = sphi 0, %s59
      %s60 = sphi 0, %s57
      %s61 = sphi 0, %s60
      %s77 = sphi 0, %s61
      %s81 = sphi 0, %s81
      %s83 = sphi 0, %s81
      %s84 = sphi 0, %s83
      %s98 = sphi 0, %s84
      %s102 = sphi 0, %s102
      %s104 = sphi 0, %s102
      %s105 = sphi 0, %s104
      %s119 = sphi 0, %s105
      %s125 = sphi 0, %s127
      %s128 = sphi 0, %s125
      %s129 = sphi 0, %s128
      %s145 = sphi 0, %s129
    $region4: #{tpu_custom_call.1} parent=1 // loop_header_branch
      %22 = sbr.rel (%p20) target = $region8
    $region5: #{tpu_custom_call.1} parent=1 // loop_body
      %s24 = ssub.s32 %s19, 1
      %s25 = ssub.s32 %s19, 2
      %s26 = sadd.s32 %s19, 1
      %s27 = ssub.s32 %s19, %s26
      %p28 = scmp.eq.s32.totalorder %s27, 0
      %s30 = sadd.s32 %s29, 1
      %s31 = scalar_select %p28, %s29, %s30
      %p34 = pneg %p28
      %p35 = scmp.eq.s32.totalorder %s19, 1
      %p36 = por %p34, %p35
      %p37 = scmp.ne.s32.totalorder %s29, %s32
      %p38 = scmp.eq.s32.totalorder %s19, 0
      %p39 = por %p37, %p38
      %p40 = scmp.ne.s32.totalorder %s29, %s32
      %p41 = scmp.eq.s32.totalorder %s24, 1
      %p42 = por %p40, %p41
      %p43 = scmp.ne.s32.totalorder %s32, %s33
      %p44 = scmp.eq.s32.totalorder %s24, 0
      %p45 = por %p43, %p44
      %p46 = scmp.ne.s32.totalorder %s32, %s33
      %p47 = scmp.eq.s32.totalorder %s25, 1
      %p48 = por %p46, %p47
      %p50 = scmp.ne.s32.totalorder %s33, %s49
      %p51 = scmp.eq.s32.totalorder %s25, 0
      %p52 = por %p50, %p51
      %s53 = sadd.s32 %s19, 1
      %s54 = sadd.s32 %s26, 1
      %s55 = ssub.s32 %s53, %s54
      %p56 = scmp.eq.s32.totalorder %s55, 0
      %s58 = sadd.s32 %s57, 1
      %s59 = scalar_select %p56, %s57, %s58
      %p62 = pneg %p56
      %p63 = scmp.eq.s32.totalorder %s19, 1
      %p64 = por %p62, %p63
      %p65 = scmp.ne.s32.totalorder %s57, %s60
      %p66 = scmp.eq.s32.totalorder %s19, 0
      %p67 = por %p65, %p66
      %p68 = scmp.ne.s32.totalorder %s57, %s60
      %p69 = scmp.eq.s32.totalorder %s24, 1
      %p70 = por %p68, %p69
      %p71 = scmp.ne.s32.totalorder %s60, %s61
      %p72 = scmp.eq.s32.totalorder %s24, 0
      %p73 = por %p71, %p72
      %p74 = scmp.ne.s32.totalorder %s60, %s61
      %p75 = scmp.eq.s32.totalorder %s25, 1
      %p76 = por %p74, %p75
      %p78 = scmp.ne.s32.totalorder %s61, %s77
      %p79 = scmp.eq.s32.totalorder %s25, 0
      %p80 = por %p78, %p79
      %s82 = sadd.s32 %s81, 1
      %p85 = scmp.eq.s32.totalorder %s19, 1
      %p86 = scmp.ne.s32.totalorder %s81, %s83
      %p87 = scmp.eq.s32.totalorder %s19, 0
      %p88 = por %p86, %p87
      %p89 = scmp.ne.s32.totalorder %s81, %s83
      %p90 = scmp.eq.s32.totalorder %s24, 1
      %p91 = por %p89, %p90
      %p92 = scmp.ne.s32.totalorder %s83, %s84
      %p93 = scmp.eq.s32.totalorder %s24, 0
      %p94 = por %p92, %p93
      %p95 = scmp.ne.s32.totalorder %s83, %s84
      %p96 = scmp.eq.s32.totalorder %s25, 1
      %p97 = por %p95, %p96
      %p99 = scmp.ne.s32.totalorder %s84, %s98
      %p100 = scmp.eq.s32.totalorder %s25, 0
      %p101 = por %p99, %p100
      %s103 = sadd.s32 %s102, 1
      %p106 = scmp.eq.s32.totalorder %s19, 1
      %p107 = scmp.ne.s32.totalorder %s102, %s104
      %p108 = scmp.eq.s32.totalorder %s19, 0
      %p109 = por %p107, %p108
      %p110 = scmp.ne.s32.totalorder %s102, %s104
      %p111 = scmp.eq.s32.totalorder %s24, 1
      %p112 = por %p110, %p111
      %p113 = scmp.ne.s32.totalorder %s104, %s105
      %p114 = scmp.eq.s32.totalorder %s24, 0
      %p115 = por %p113, %p114
      %p116 = scmp.ne.s32.totalorder %s104, %s105
      %p117 = scmp.eq.s32.totalorder %s25, 1
      %p118 = por %p116, %p117
      %p120 = scmp.ne.s32.totalorder %s105, %s119
      %p121 = scmp.eq.s32.totalorder %s25, 0
      %p122 = por %p120, %p121
      %s123 = ssub.s32 %s19, %s26
      %p124 = scmp.eq.s32.totalorder %s123, 0
      %s126 = sadd.s32 %s125, 1
      %s127 = scalar_select %p124, %s125, %s126
      %p130 = pneg %p124
      %p131 = scmp.eq.s32.totalorder %s19, 1
      %p132 = por %p130, %p131
      %p133 = scmp.ne.s32.totalorder %s125, %s128
      %p134 = scmp.eq.s32.totalorder %s19, 0
      %p135 = por %p133, %p134
      %p136 = scmp.ne.s32.totalorder %s125, %s128
      %p137 = scmp.eq.s32.totalorder %s24, 1
      %p138 = por %p136, %p137
      %p139 = scmp.ne.s32.totalorder %s128, %s129
      %p140 = scmp.eq.s32.totalorder %s24, 0
      %p141 = por %p139, %p140
      %p142 = scmp.ne.s32.totalorder %s128, %s129
      %p143 = scmp.eq.s32.totalorder %s25, 1
      %p144 = por %p142, %p143
      %p146 = scmp.ne.s32.totalorder %s129, %s145
      %p147 = scmp.eq.s32.totalorder %s25, 0
      %p148 = por %p146, %p147
      %p149 = scmp.le.s32.totalorder 1, %s19
      %p150 = scmp.lt.s32.totalorder %s19, 3
      %p151 = pnand %p149, %p150
      %p152 = pneg %p151
      // Predicated region
      $region9: #{tpu_custom_call.1} parent=5 // pred_check
        _
      $region10: #{tpu_custom_call.1} parent=5 // pred_check_branch
        %154 = sbr.rel (%p151) target = $region12
      $region11: #{tpu_custom_call.1} parent=5 // pred_region
        %s155 = ssub.s32 %s19, 1
        // Predicated region
        $region13: #{tpu_custom_call.1} parent=11 // pred_check
          %p156 = pneg %p94
        $region14: #{tpu_custom_call.1} parent=11 // pred_check_branch
          %158 = sbr.rel (%p156) target = $region16
        $region15: #{tpu_custom_call.1} parent=11 // pred_region
          _
        $region16: #{tpu_custom_call.1} parent=11 // pred_fallthru
          _
        // Predicated region
        $region17: #{tpu_custom_call.1} parent=11 // pred_check
          %p159 = pneg %p115
        $region18: #{tpu_custom_call.1} parent=11 // pred_check_branch
          %161 = sbr.rel (%p159) target = $region20
        $region19: #{tpu_custom_call.1} parent=11 // pred_region
          _
        $region20: #{tpu_custom_call.1} parent=11 // pred_fallthru
          _
      $region12: #{tpu_custom_call.1} parent=5 // pred_fallthru
        _
      %p162 = scmp.lt.s32.totalorder %s19, 2
      // Predicated region
      $region21: #{tpu_custom_call.1} parent=5 // pred_check
        %p163 = pneg %p162
      $region22: #{tpu_custom_call.1} parent=5 // pred_check_branch
        %165 = sbr.rel (%p163) target = $region24
      $region23: #{tpu_custom_call.1} parent=5 // pred_region
        // Predicated region
        $region25: #{tpu_custom_call.1} parent=23 // pred_check
          %p166 = pneg %p39
        $region26: #{tpu_custom_call.1} parent=23 // pred_check_branch
          %168 = sbr.rel (%p166) target = $region28
        $region27: #{tpu_custom_call.1} parent=23 // pred_region
          %s169 = sand.u32 %s29, 1
          %s170 = scalar_lea.sflag [#allocation3], %s169
          %s171 = sand.u32 %s29, 1
          %s172 = smul.addr %s171, 16
          %s173 = scalar_lea.vmem [#allocation2], %s172
          %175 = vsyncadd %s170, 0
          %s176 = smul.addr %s19, 8
          %s177 = scalar_lea.hbm %s0, %s176
          %s178 = sshll.u32 %s177, 4
          %s179 = int_to_ptr.hbm [resolvable:$true] %s178
          %s180 = sshll.u32 %s173, 4
          %s181 = int_to_ptr.vmem [resolvable:$true] %s180
          %186 = dma.hbm_to_vmem [thread:$0]  %s179, 256, %s181, %s170, 384, 128, 8
        $region28: #{tpu_custom_call.1} parent=23 // pred_fallthru
          _
        // Predicated region
        $region29: #{tpu_custom_call.1} parent=23 // pred_check
          %p187 = pneg %p67
        $region30: #{tpu_custom_call.1} parent=23 // pred_check_branch
          %189 = sbr.rel (%p187) target = $region32
        $region31: #{tpu_custom_call.1} parent=23 // pred_region
          %s190 = sand.u32 %s57, 1
          %s191 = scalar_lea.sflag [#allocation6], %s190
          %s192 = sand.u32 %s57, 1
          %s193 = smul.addr %s192, 16
          %s194 = scalar_lea.vmem [#allocation5], %s193
          %s195 = sadd.s32 %s19, 1
          %197 = vsyncadd %s191, 0
          %s198 = smul.addr %s195, 8
          %s199 = scalar_lea.hbm %s1, %s198
          %s200 = sshll.u32 %s199, 4
          %s201 = int_to_ptr.hbm [resolvable:$true] %s200
          %s202 = sshll.u32 %s194, 4
          %s203 = int_to_ptr.vmem [resolvable:$true] %s202
          %208 = dma.hbm_to_vmem [thread:$0]  %s201, 256, %s203, %s191, 384, 128, 8
        $region32: #{tpu_custom_call.1} parent=23 // pred_fallthru
          _
      $region24: #{tpu_custom_call.1} parent=5 // pred_fallthru
        _
      %p209 = scmp.le.s32.totalorder 1, %s19
      %p210 = scmp.lt.s32.totalorder %s19, 3
      %p211 = pnand %p209, %p210
      %p212 = pneg %p211
      // Predicated region
      $region33: #{tpu_custom_call.1} parent=5 // pred_check
        _
      $region34: #{tpu_custom_call.1} parent=5 // pred_check_branch
        %214 = sbr.rel (%p211) target = $region36
      $region35: #{tpu_custom_call.1} parent=5 // pred_region
        %s215 = ssub.s32 %s19, 1
        %s216 = sand.u32 %s32, 1
        %s217 = scalar_lea.sflag [#allocation3], %s216
        %s218 = sand.u32 %s32, 1
        %s219 = smul.addr %s218, 16
        %s220 = scalar_lea.vmem [#allocation2], %s219
        // Predicated region
        $region37: #{tpu_custom_call.1} parent=35 // pred_check
          %p221 = pneg %p45
        $region38: #{tpu_custom_call.1} parent=35 // pred_check_branch
          %223 = sbr.rel (%p221) target = $region40
        $region39: #{tpu_custom_call.1} parent=35 // pred_region
          %225 = dma.done %s217, 256
        $region40: #{tpu_custom_call.1} parent=35 // pred_fallthru
          _
        %s226 = sand.u32 %s60, 1
        %s227 = scalar_lea.sflag [#allocation6], %s226
        %s228 = sand.u32 %s60, 1
        %s229 = smul.addr %s228, 16
        %s230 = scalar_lea.vmem [#allocation5], %s229
        // Predicated region
        $region41: #{tpu_custom_call.1} parent=35 // pred_check
          %p231 = pneg %p73
        $region42: #{tpu_custom_call.1} parent=35 // pred_check_branch
          %233 = sbr.rel (%p231) target = $region44
        $region43: #{tpu_custom_call.1} parent=35 // pred_region
          %235 = dma.done %s227, 256
        $region44: #{tpu_custom_call.1} parent=35 // pred_fallthru
          _
        %s236 = sand.u32 %s32, 1
        %s237 = scalar_lea.sflag [#allocation3], %s236
        %s238 = sand.u32 %s32, 1
        %s239 = smul.addr %s238, 16
        %s240 = scalar_lea.vmem [#allocation2], %s239
        %p241 = pneg %p45
        %p242 = pneg %p42
        %s243 = sand.u32 %s60, 1
        %s244 = scalar_lea.sflag [#allocation6], %s243
        %s245 = sand.u32 %s60, 1
        %s246 = smul.addr %s245, 16
        %s247 = scalar_lea.vmem [#allocation5], %s246
        %p248 = pneg %p73
        %p249 = pneg %p70
        %p250 = pneg %p94
        %p251 = pneg %p91
        %p252 = pneg %p115
        %p253 = pneg %p112
        %p254 = pneg %p141
        %p255 = pneg %p138
        %s256 = sand.u32 %s128, 1
        %s257 = scalar_lea.sflag [#allocation4], %s256
        %s258 = sand.u32 %s128, 1
        %s259 = smul.addr %s258, 16
        %s260 = scalar_lea.vmem [#allocation7], %s259
        %s261 = sadd.s32 %s24, 1
        %v262 = vld [vmem:[%s220] sm:$0xff]
        %v263 = vld [vmem:[%s220 + $0x8] sm:$0xff]
        %v264 = vld [vmem:[%s230] sm:$0xff]
        %v265 = vld [vmem:[%s230 + $0x8] sm:$0xff]
        %vm266 = vcmp.eq.f32.partialorder %v262, -inf
        %vm267 = vcmp.eq.f32.partialorder %v264, -inf
        %vm268 = vcmp.eq.f32.partialorder %v263, -inf
        %vm269 = vcmp.eq.f32.partialorder %v265, -inf
        %v270 = vsel %vm266, 0.0, %v262
        %v271 = vsel %vm267, 0.0, %v264
        %v272 = vsel %vm268, 0.0, %v263
        %v273 = vsel %vm269, 0.0, %v265
        %v274 = vld [vmem:[%s2] sm:$0xff]
        %276 = vrot.lane.b32.xlu0 %v274, 124
        %v277 = vpop.permute.xlu0 %276
        %v279 = vrot.slane %v270, 4
        %vm280 = vcmask 31744
        %v281 = vsel %vm280, %v277, 0
        %vm283 = vcmask 1043456
        %v284 = vsel %vm283, %v279, 0
        %286 = vmatpush.msra.mxu0 0.0
        %287 = vmatpush.msra.mxu0 0.0
        %288 = vmatpush.msra.mxu0 0.0
        %289 = vmatpush.msra.mxu0 0.0
        %290 = vmatpush.msra.mxu0 0.0
        %291 = vmatpush.msra.mxu0 0.0
        %292 = vmatpush.msra.mxu0 0.0
        %293 = vmatpush.msra.mxu0 0.0
        %294 = vmatpush.msra.mxu0 0.0
        %295 = vmatpush.msra.mxu0 0.0
        %296 = vmatpush.msra.mxu0 0.0
        %297 = vmatpush.msra.mxu0 0.0
        %298 = vmatpush.msra.mxu0 0.0
        %299 = vmatpush.msra.mxu0 0.0
        %300 = vmatpush.msra.mxu0 0.0
        %301 = vmatpush.msra.mxu0 %v284
        %302 = vmatmul.f32.gmra.mxu0 %v281
        %v303 = vpop.f32.mrf.mxu0
        %v304 = vadd.f32 0.0, %v303
        %305 = vdwg.mxu0
        %v306 = vsel %vm280, %v274, 0
        %v308 = vsel %vm283, %v270, 0
        %310 = vmatpush.msra.mxu0 0.0
        %311 = vmatpush.msra.mxu0 0.0
        %312 = vmatpush.msra.mxu0 0.0
        %313 = vmatpush.msra.mxu0 0.0
        %314 = vmatpush.msra.mxu0 0.0
        %315 = vmatpush.msra.mxu0 0.0
        %316 = vmatpush.msra.mxu0 0.0
        %317 = vmatpush.msra.mxu0 0.0
        %318 = vmatpush.msra.mxu0 0.0
        %319 = vmatpush.msra.mxu0 0.0
        %320 = vmatpush.msra.mxu0 0.0
        %321 = vmatpush.msra.mxu0 0.0
        %322 = vmatpush.msra.mxu0 0.0
        %323 = vmatpush.msra.mxu0 0.0
        %324 = vmatpush.msra.mxu0 0.0
        %325 = vmatpush.msra.mxu0 %v308
        %326 = vmatmul.f32.gmra.mxu0 %v306
        %v327 = vpop.f32.mrf.mxu0
        %v328 = vadd.f32 %v304, %v327
        %329 = vdwg.mxu0
        %v331 = vrot.slane %v262, 4
        %v333 = vmax.f32 %v262, %v331
        %334 = vrot.lane.b32.xlu0 %v274, 120
        %v335 = vpop.permute.xlu0 %334
        %337 = vrot.lane.b32.xlu0 %v270, 127
        %v338 = vpop.permute.xlu0 %337
        %339 = vrot.lane.b32.xlu0 %v271, 127
        %v340 = vpop.permute.xlu0 %339
        %vm341 = vcmask 1039360
        %v342 = vsel %vm341, %v338, %v340
        %v343 = vsel %vm280, %v335, 0
        %v345 = vsel %vm283, %v342, 0
        %347 = vmatpush.msra.mxu0 0.0
        %348 = vmatpush.msra.mxu0 0.0
        %349 = vmatpush.msra.mxu0 0.0
        %350 = vmatpush.msra.mxu0 0.0
        %351 = vmatpush.msra.mxu0 0.0
        %352 = vmatpush.msra.mxu0 0.0
        %353 = vmatpush.msra.mxu0 0.0
        %354 = vmatpush.msra.mxu0 0.0
        %355 = vmatpush.msra.mxu0 0.0
        %356 = vmatpush.msra.mxu0 0.0
        %357 = vmatpush.msra.mxu0 0.0
        %358 = vmatpush.msra.mxu0 0.0
        %359 = vmatpush.msra.mxu0 0.0
        %360 = vmatpush.msra.mxu0 0.0
        %361 = vmatpush.msra.mxu0 0.0
        %362 = vmatpush.msra.mxu0 %v345
        %363 = vmatmul.f32.gmra.mxu0 %v343
        %v364 = vpop.f32.mrf.mxu0
        %v365 = vadd.f32 0.0, %v364
        %366 = vdwg.mxu0
        %v367 = vadd.f32 %v328, %v365
        %369 = vrot.lane.b32.xlu0 %v262, 127
        %v370 = vpop.permute.xlu0 %369
        %371 = vrot.lane.b32.xlu0 %v264, 127
        %v372 = vpop.permute.xlu0 %371
        %v373 = vsel %vm341, %v370, %v372
        %v375 = vmax.f32 %v333, %v373
        %376 = vrot.lane.b32.xlu0 %v274, 116
        %v377 = vpop.permute.xlu0 %376
        %v378 = vsel %vm280, %v377, 0
        %v381 = vsel %vm283, %v272, 0
        %383 = vmatpush.msra.mxu0 0.0
        %384 = vmatpush.msra.mxu0 0.0
        %385 = vmatpush.msra.mxu0 0.0
        %386 = vmatpush.msra.mxu0 0.0
        %387 = vmatpush.msra.mxu0 0.0
        %388 = vmatpush.msra.mxu0 0.0
        %389 = vmatpush.msra.mxu0 0.0
        %390 = vmatpush.msra.mxu0 0.0
        %391 = vmatpush.msra.mxu0 0.0
        %392 = vmatpush.msra.mxu0 0.0
        %393 = vmatpush.msra.mxu0 0.0
        %394 = vmatpush.msra.mxu0 0.0
        %395 = vmatpush.msra.mxu0 0.0
        %396 = vmatpush.msra.mxu0 0.0
        %397 = vmatpush.msra.mxu0 0.0
        %398 = vmatpush.msra.mxu0 %v381
        %399 = vmatmul.f32.gmra.mxu0 %v378
        %v400 = vpop.f32.mrf.mxu0
        %v401 = vadd.f32 0.0, %v400
        %402 = vdwg.mxu0
        %v403 = vadd.f32 %v367, %v401
        %v404 = vmax.f32 %v375, %v263
        %405 = vrot.lane.b32.xlu0 %v274, 112
        %v406 = vpop.permute.xlu0 %405
        %v407 = vrot.slane %v272, 4
        %v408 = vsel %vm280, %v406, 0
        %v410 = vsel %vm283, %v407, 0
        %412 = vmatpush.msra.mxu0 0.0
        %413 = vmatpush.msra.mxu0 0.0
        %414 = vmatpush.msra.mxu0 0.0
        %415 = vmatpush.msra.mxu0 0.0
        %416 = vmatpush.msra.mxu0 0.0
        %417 = vmatpush.msra.mxu0 0.0
        %418 = vmatpush.msra.mxu0 0.0
        %419 = vmatpush.msra.mxu0 0.0
        %420 = vmatpush.msra.mxu0 0.0
        %421 = vmatpush.msra.mxu0 0.0
        %422 = vmatpush.msra.mxu0 0.0
        %423 = vmatpush.msra.mxu0 0.0
        %424 = vmatpush.msra.mxu0 0.0
        %425 = vmatpush.msra.mxu0 0.0
        %426 = vmatpush.msra.mxu0 0.0
        %427 = vmatpush.msra.mxu0 %v410
        %428 = vmatmul.f32.gmra.mxu0 %v408
        %v429 = vpop.f32.mrf.mxu0
        %v430 = vadd.f32 0.0, %v429
        %431 = vdwg.mxu0
        %v432 = vadd.f32 %v403, %v430
        %v434 = vrot.slane %v263, 4
        %v436 = vmax.f32 %v404, %v434
        %437 = vrot.lane.b32.xlu0 %v274, 108
        %v438 = vpop.permute.xlu0 %437
        %440 = vrot.lane.b32.xlu0 %v272, 127
        %v441 = vpop.permute.xlu0 %440
        %442 = vrot.lane.b32.xlu0 %v273, 127
        %v443 = vpop.permute.xlu0 %442
        %v444 = vsel %vm341, %v441, %v443
        %v445 = vsel %vm280, %v438, 0
        %v447 = vsel %vm283, %v444, 0
        %449 = vmatpush.msra.mxu0 0.0
        %450 = vmatpush.msra.mxu0 0.0
        %451 = vmatpush.msra.mxu0 0.0
        %452 = vmatpush.msra.mxu0 0.0
        %453 = vmatpush.msra.mxu0 0.0
        %454 = vmatpush.msra.mxu0 0.0
        %455 = vmatpush.msra.mxu0 0.0
        %456 = vmatpush.msra.mxu0 0.0
        %457 = vmatpush.msra.mxu0 0.0
        %458 = vmatpush.msra.mxu0 0.0
        %459 = vmatpush.msra.mxu0 0.0
        %460 = vmatpush.msra.mxu0 0.0
        %461 = vmatpush.msra.mxu0 0.0
        %462 = vmatpush.msra.mxu0 0.0
        %463 = vmatpush.msra.mxu0 0.0
        %464 = vmatpush.msra.mxu0 %v447
        %465 = vmatmul.f32.gmra.mxu0 %v445
        %v466 = vpop.f32.mrf.mxu0
        %v467 = vadd.f32 0.0, %v466
        %468 = vdwg.mxu0
        %v469 = vadd.f32 %v432, %v467
        %471 = vrot.lane.b32.xlu0 %v263, 127
        %v472 = vpop.permute.xlu0 %471
        %473 = vrot.lane.b32.xlu0 %v265, 127
        %v474 = vpop.permute.xlu0 %473
        %v475 = vsel %vm341, %v472, %v474
        %v477 = vmax.f32 %v436, %v475
        %478 = vrot.lane.b32.xlu0 %v274, 104
        %v479 = vpop.permute.xlu0 %478
        %480 = vrot.lane.b32.xlu0 %v270, 119
        %v481 = vpop.permute.xlu0 %480
        %482 = vrot.lane.b32.xlu0 %v271, 119
        %v483 = vpop.permute.xlu0 %482
        %vm484 = vcmask 973824
        %v485 = vsel %vm484, %v481, %v483
        %v486 = vsel %vm280, %v479, 0
        %v488 = vsel %vm283, %v485, 0
        %490 = vmatpush.msra.mxu0 0.0
        %491 = vmatpush.msra.mxu0 0.0
        %492 = vmatpush.msra.mxu0 0.0
        %493 = vmatpush.msra.mxu0 0.0
        %494 = vmatpush.msra.mxu0 0.0
        %495 = vmatpush.msra.mxu0 0.0
        %496 = vmatpush.msra.mxu0 0.0
        %497 = vmatpush.msra.mxu0 0.0
        %498 = vmatpush.msra.mxu0 0.0
        %499 = vmatpush.msra.mxu0 0.0
        %500 = vmatpush.msra.mxu0 0.0
        %501 = vmatpush.msra.mxu0 0.0
        %502 = vmatpush.msra.mxu0 0.0
        %503 = vmatpush.msra.mxu0 0.0
        %504 = vmatpush.msra.mxu0 0.0
        %505 = vmatpush.msra.mxu0 %v488
        %506 = vmatmul.f32.gmra.mxu0 %v486
        %v507 = vpop.f32.mrf.mxu0
        %v508 = vadd.f32 0.0, %v507
        %509 = vdwg.mxu0
        %v510 = vadd.f32 %v469, %v508
        %511 = vrot.lane.b32.xlu0 %v262, 119
        %v512 = vpop.permute.xlu0 %511
        %513 = vrot.lane.b32.xlu0 %v264, 119
        %v514 = vpop.permute.xlu0 %513
        %v515 = vsel %vm484, %v512, %v514
        %v517 = vmax.f32 %v477, %v515
        %518 = vrot.lane.b32.xlu0 %v274, 100
        %v519 = vpop.permute.xlu0 %518
        %v520 = vrot.slane %v271, 4
        %521 = vrot.lane.b32.xlu0 %v279, 119
        %v522 = vpop.permute.xlu0 %521
        %523 = vrot.lane.b32.xlu0 %v520, 119
        %v524 = vpop.permute.xlu0 %523
        %v525 = vsel %vm484, %v522, %v524
        %v526 = vsel %vm280, %v519, 0
        %v528 = vsel %vm283, %v525, 0
        %530 = vmatpush.msra.mxu0 0.0
        %531 = vmatpush.msra.mxu0 0.0
        %532 = vmatpush.msra.mxu0 0.0
        %533 = vmatpush.msra.mxu0 0.0
        %534 = vmatpush.msra.mxu0 0.0
        %535 = vmatpush.msra.mxu0 0.0
        %536 = vmatpush.msra.mxu0 0.0
        %537 = vmatpush.msra.mxu0 0.0
        %538 = vmatpush.msra.mxu0 0.0
        %539 = vmatpush.msra.mxu0 0.0
        %540 = vmatpush.msra.mxu0 0.0
        %541 = vmatpush.msra.mxu0 0.0
        %542 = vmatpush.msra.mxu0 0.0
        %543 = vmatpush.msra.mxu0 0.0
        %544 = vmatpush.msra.mxu0 0.0
        %545 = vmatpush.msra.mxu0 %v528
        %546 = vmatmul.f32.gmra.mxu0 %v526
        %v547 = vpop.f32.mrf.mxu0
        %v548 = vadd.f32 0.0, %v547
        %549 = vdwg.mxu0
        %v550 = vadd.f32 %v510, %v548
        %v551 = vrot.slane %v264, 4
        %552 = vrot.lane.b32.xlu0 %v331, 119
        %v553 = vpop.permute.xlu0 %552
        %554 = vrot.lane.b32.xlu0 %v551, 119
        %v555 = vpop.permute.xlu0 %554
        %v556 = vsel %vm484, %v553, %v555
        %v558 = vmax.f32 %v517, %v556
        %559 = vrot.lane.b32.xlu0 %v274, 96
        %v560 = vpop.permute.xlu0 %559
        %561 = vrot.lane.b32.xlu0 %v270, 118
        %v562 = vpop.permute.xlu0 %561
        %563 = vrot.lane.b32.xlu0 %v271, 118
        %v564 = vpop.permute.xlu0 %563
        %vm565 = vcmask 965632
        %v566 = vsel %vm565, %v562, %v564
        %v567 = vsel %vm280, %v560, 0
        %v569 = vsel %vm283, %v566, 0
        %571 = vmatpush.msra.mxu0 0.0
        %572 = vmatpush.msra.mxu0 0.0
        %573 = vmatpush.msra.mxu0 0.0
        %574 = vmatpush.msra.mxu0 0.0
        %575 = vmatpush.msra.mxu0 0.0
        %576 = vmatpush.msra.mxu0 0.0
        %577 = vmatpush.msra.mxu0 0.0
        %578 = vmatpush.msra.mxu0 0.0
        %579 = vmatpush.msra.mxu0 0.0
        %580 = vmatpush.msra.mxu0 0.0
        %581 = vmatpush.msra.mxu0 0.0
        %582 = vmatpush.msra.mxu0 0.0
        %583 = vmatpush.msra.mxu0 0.0
        %584 = vmatpush.msra.mxu0 0.0
        %585 = vmatpush.msra.mxu0 0.0
        %586 = vmatpush.msra.mxu0 %v569
        %587 = vmatmul.f32.gmra.mxu0 %v567
        %v588 = vpop.f32.mrf.mxu0
        %v589 = vadd.f32 0.0, %v588
        %590 = vdwg.mxu0
        %v591 = vadd.f32 %v550, %v589
        %592 = vrot.lane.b32.xlu0 %v262, 118
        %v593 = vpop.permute.xlu0 %592
        %594 = vrot.lane.b32.xlu0 %v264, 118
        %v595 = vpop.permute.xlu0 %594
        %v596 = vsel %vm565, %v593, %v595
        %v598 = vmax.f32 %v558, %v596
        %v599 = vld [vmem:[%s3] sm:$0xff]
        %601 = vset.pattern.permute.xlu0 0
        %602 = vperm.xlu0 %601, %v599
        %v603 = vpop.permute.xlu0 %602
        %v605 = vadd.f32 %v591, %v603
        %v606 = vmax.f32 %v605, 0.0
        %607 = vst [vmem:[%s260] sm:$0xff] %v606
        %608 = vst [vmem:[%s260 + $0x8] sm:$0xf] %v598
        %s609 = sand.u32 %s128, 1
        %s610 = scalar_lea.sflag [#allocation4], %s609
        %s611 = sand.u32 %s128, 1
        %s612 = smul.addr %s611, 16
        %s613 = scalar_lea.vmem [#allocation7], %s612
        // Predicated region
        $region45: #{tpu_custom_call.1} parent=35 // pred_check
          %p614 = pneg %p138
        $region46: #{tpu_custom_call.1} parent=35 // pred_check_branch
          %616 = sbr.rel (%p614) target = $region48
        $region47: #{tpu_custom_call.1} parent=35 // pred_region
          %618 = vsyncadd %s610, 0
          %s619 = smul.addr %s24, 8
          %s620 = scalar_lea.hbm %s4, %s619
          %s621 = sshll.u32 %s613, 4
          %s622 = int_to_ptr.vmem [resolvable:$true] %s621
          %s623 = sshll.u32 %s620, 4
          %s624 = int_to_ptr.hbm [resolvable:$true] %s623
          %629 = dma.vmem_to_hbm [thread:$0]  %s622, 256, %s624, %s610, 128, 256, 8
        $region48: #{tpu_custom_call.1} parent=35 // pred_fallthru
          _
      $region36: #{tpu_custom_call.1} parent=5 // pred_fallthru
        _
      %p630 = scmp.le.s32.totalorder 2, %s19
      // Predicated region
      $region49: #{tpu_custom_call.1} parent=5 // pred_check
        %p631 = pneg %p630
      $region50: #{tpu_custom_call.1} parent=5 // pred_check_branch
        %633 = sbr.rel (%p631) target = $region52
      $region51: #{tpu_custom_call.1} parent=5 // pred_region
        %s634 = ssub.s32 %s19, 2
        // Predicated region
        $region53: #{tpu_custom_call.1} parent=51 // pred_check
          %p635 = pneg %p144
        $region54: #{tpu_custom_call.1} parent=51 // pred_check_branch
          %637 = sbr.rel (%p635) target = $region56
        $region55: #{tpu_custom_call.1} parent=51 // pred_region
          %s638 = sand.u32 %s129, 1
          %s639 = scalar_lea.sflag [#allocation4], %s638
          %s640 = sand.u32 %s129, 1
          %s641 = smul.addr %s640, 16
          %s642 = scalar_lea.vmem [#allocation7], %s641
          %644 = dma.done %s639, 256
        $region56: #{tpu_custom_call.1} parent=51 // pred_fallthru
          _
      $region52: #{tpu_custom_call.1} parent=5 // pred_fallthru
        _
    $region6: #{tpu_custom_call.1} parent=1 // loop_footer
      %s23 = sadd.s32 1, %s19
    $region7: #{tpu_custom_call.1} parent=1 // loop_footer_branch
      %18 = sbr.rel target = $region3
    $region8: #{tpu_custom_call.1} parent=1 // loop_exit
      _
    %645 = vsyncpa [#allocation3], 1
    %s646 = scalar_lea.sflag [#allocation3], 1
    %647 = vsyncpa %s646, 1
    %648 = vsyncpa [#allocation6], 1
    %s649 = scalar_lea.sflag [#allocation6], 1
    %650 = vsyncpa %s649, 1
    %651 = vsyncpa [#allocation4], 1
    %s652 = scalar_lea.sflag [#allocation4], 1
    %653 = vsyncpa %s652, 1

</llo_original>
